<compile_context>
chip_gen: v7x
topology: tpu7x:2x2x1
jax: 0.10.0
libtpu: 0.0.40
codegen_flags: <defaults>
</compile_context>

<pallas_src>
import functools

import jax
import jax.numpy as jnp
import numpy as np
from jax import lax
from jax.experimental import pallas as pl
from jax.experimental.pallas import tpu as pltpu


def _qr_embedding_bag_kernel(idx_ref, wq_ref, wr_ref, *out_refs,
                             num_collisions, mode, operation):
    """One grid step processes a tile of TB bags (all rows of idx_ref's block)."""
    tb, n = idx_ref.shape
    vq, dq = wq_ref.shape
    vr, dr = wr_ref.shape

    idx = idx_ref[...]                                        # (TB, N) int32

    # Quotient / remainder split.  Indices are documented non-negative, so
    # floor-div == torch's truncating `(input / C).long()`.
    if (num_collisions & (num_collisions - 1)) == 0:          # power of two: shift & mask
        shift = int(num_collisions).bit_length() - 1
        q_idx = jnp.right_shift(idx, shift)
        r_idx = jnp.bitwise_and(idx, num_collisions - 1)
    else:
        q_idx = idx // num_collisions
        r_idx = jnp.remainder(idx, num_collisions)

    # Per-bag histograms: counts[b, v] = #{j : idx[b, j] maps to row v}.
    # Built with N broadcast compares on the VPU (N is a small compile-time
    # constant), so the whole bag reduction folds into one MXU matmul below.
    iota_q = lax.broadcasted_iota(jnp.int32, (tb, vq), 1)
    iota_r = lax.broadcasted_iota(jnp.int32, (tb, vr), 1)
    counts_q = jnp.zeros((tb, vq), jnp.float32)
    counts_r = jnp.zeros((tb, vr), jnp.float32)
    for j in range(n):                                        # static unroll, N small
        qc = q_idx[:, j:j + 1]                                # (TB, 1)
        rc = r_idx[:, j:j + 1]
        counts_q = counts_q + (qc == iota_q).astype(jnp.float32)
        counts_r = counts_r + (rc == iota_r).astype(jnp.float32)

    # Quotient path: one MXU matmul per batch tile.  Counts are small exact
    # integers, so a bf16 table still yields exact f32 accumulation.
    bag_q = jnp.dot(counts_q.astype(wq_ref.dtype), wq_ref[...],
                    preferred_element_type=jnp.float32)       # (TB, Dq) f32

    # Remainder path: Vr == num_collisions is tiny (e.g. 4); a K=4 matmul would
    # waste >95% of an MXU pass, so do the weighted row sum on the VPU instead.
    wr = wr_ref[...].astype(jnp.float32)                      # (Vr, Dr)
    bag_r = counts_r[:, 0:1] * wr[0:1, :]
    for v in range(1, vr):
        bag_r = bag_r + counts_r[:, v:v + 1] * wr[v:v + 1, :]  # (TB, Dr)

    if mode == "mean":
        inv_n = jnp.float32(1.0 / n)
        bag_q = bag_q * inv_n
        bag_r = bag_r * inv_n
    # TODO(synk): mode="max", per_sample_weights and max_norm renormalization are
    # not implemented (module defaults: mode="mean", no weights, max_norm=None).

    if operation == "mult":
        out_refs[0][...] = (bag_q * bag_r).astype(out_refs[0].dtype)
    elif operation == "add":
        out_refs[0][...] = (bag_q + bag_r).astype(out_refs[0].dtype)
    else:  # "concat": two lane-dense outputs; wrapper concatenates.
        out_refs[0][...] = bag_q.astype(out_refs[0].dtype)
        out_refs[1][...] = bag_r.astype(out_refs[1].dtype)


def _round_up(x, m):
    return (x + m - 1) // m * m


def qr_embedding_bag(indices, weight_q, weight_r, *, num_collisions,
                     mode="mean", operation="mult", block_b=128,
                     compute_dtype=None):
    """Pallas forward of QREmbeddingBag for 2-D `indices` (offsets=None)."""
    assert indices.ndim == 2, "only 2-D bag input (offsets=None) supported"
    assert mode in ("sum", "mean")          # TODO(synk): mode="max" not supported
    assert operation in ("mult", "add", "concat")
    B, N = indices.shape
    vq, dq = weight_q.shape
    vr, dr = weight_r.shape
    assert vr == num_collisions, "remainder table must have num_collisions rows"
    if operation in ("mult", "add"):
        assert dq == dr, "Embedding dimensions do not match!"

    out_dtype = jnp.result_type(weight_q.dtype, weight_r.dtype)
    if compute_dtype is not None:
        # MXU compute dtype for the quotient-table matmul (e.g. jnp.bfloat16):
        # halves the VMEM-resident table and doubles MXU throughput; counts are
        # small exact integers so the f32 accumulation stays exact.
        weight_q = weight_q.astype(compute_dtype)
        weight_r = weight_r.astype(compute_dtype)

    # Batch tile: sublane-aligned (multiple of 8); default 128 bags per grid step.
    tb = max(8, min(_round_up(block_b, 8), _round_up(B, 8)))
    b_pad = _round_up(B, tb)

    idx = indices.astype(jnp.int32)
    if b_pad != B:
        # Padded bags gather row 0 (valid) and are sliced off below.
        idx = jnp.pad(idx, ((0, b_pad - B), (0, 0)))

    kernel = functools.partial(
        _qr_embedding_bag_kernel,
        num_collisions=int(num_collisions), mode=mode, operation=operation)

    if operation == "concat":
        out_shape = (jax.ShapeDtypeStruct((b_pad, dq), out_dtype),
                     jax.ShapeDtypeStruct((b_pad, dr), out_dtype))
        out_specs = (pl.BlockSpec((tb, dq), lambda i: (i, 0)),
                     pl.BlockSpec((tb, dr), lambda i: (i, 0)))
    else:
        out_shape = jax.ShapeDtypeStruct((b_pad, dq), out_dtype)
        out_specs = pl.BlockSpec((tb, dq), lambda i: (i, 0))

    # Both tables stay fully VMEM-resident (same block every grid step, so the
    # pipeline does not re-DMA them).  Fine for QR-compressed vocabularies.
    # TODO(synk): for very large Vq*Dq (v7x has 64 MiB VMEM) add a vocab grid
    # axis over weight_q and accumulate partial bag sums in a VMEM scratch.
    grid_spec = pltpu.PrefetchScalarGridSpec(
        num_scalar_prefetch=0,
        grid=(b_pad // tb,),
        in_specs=[
            pl.BlockSpec((tb, N), lambda i: (i, 0)),
            pl.BlockSpec((vq, dq), lambda i: (0, 0)),
            pl.BlockSpec((vr, dr), lambda i: (0, 0)),
        ],
        out_specs=out_specs,
        scratch_shapes=[],
    )

    out = pl.pallas_call(
        kernel,
        out_shape=out_shape,
        grid_spec=grid_spec,
        compiler_params=pltpu.CompilerParams(
            # Batch tiles are fully independent -> shard across TensorCores (v7x).
            dimension_semantics=("parallel",)),
    )(idx, weight_q, weight_r)

    if operation == "concat":
        out_q, out_r = out
        return jnp.concatenate([out_q[:B], out_r[:B]], axis=1)
    return out[:B]


def _reference(indices, weight_q, weight_r, *, num_collisions, mode, operation):
    """Pure-JAX reference mirroring the PyTorch module's forward."""
    q = indices // num_collisions
    r = jnp.remainder(indices, num_collisions)
    eq = weight_q.astype(jnp.float32)[q]            # (B, N, Dq)
    er = weight_r.astype(jnp.float32)[r]            # (B, N, Dr)
    if mode == "mean":
        bq, br = eq.mean(axis=1), er.mean(axis=1)
    else:
        bq, br = eq.sum(axis=1), er.sum(axis=1)
    if operation == "mult":
        return bq * br
    if operation == "add":
        return bq + br
    return jnp.concatenate([bq, br], axis=1)


if __name__ == "__main__":
    # Module config (synthetic, deterministic init).
    num_embeddings = 64          # num_categories
    embedding_dim = 32
    num_collisions = 4

    vq = int(np.ceil(num_embeddings / num_collisions))   # quotient table rows
    vr = num_collisions                                   # remainder table rows

    key = jax.random.PRNGKey(0)
    k_wq, k_wr, k_idx1, k_idx2 = jax.random.split(key, 4)

    # reset_parameters: uniform_(w, sqrt(1/num_categories)) -> U[sqrt(1/C), 1.0]
    lo = float(np.sqrt(1.0 / num_embeddings))
    weight_q = jax.random.uniform(k_wq, (vq, embedding_dim), jnp.float32, lo, 1.0)
    weight_r = jax.random.uniform(k_wr, (vr, embedding_dim), jnp.float32, lo, 1.0)

    # Small 2-D bag inputs: B bags of fixed length N (offsets must be None).
    B1, B2, N = 2, 20, 8
    idx_small = jax.random.randint(k_idx1, (B1, N), 0, num_embeddings, jnp.int32)
    idx_multi = jax.random.randint(k_idx2, (B2, N), 0, num_embeddings, jnp.int32)

    # 1) Default module config (operation="mult", mode="mean"), f32 tables.
    out = qr_embedding_bag(idx_small, weight_q, weight_r,
                           num_collisions=num_collisions,
                           mode="mean", operation="mult")
    out = jax.block_until_ready(out)
    ref = _reference(idx_small, weight_q, weight_r,
                     num_collisions=num_collisions, mode="mean", operation="mult")
    np.testing.assert_allclose(np.asarray(out), np.asarray(ref), rtol=1e-5, atol=1e-5)

    # 2) Multi-tile grid + padding path, operation="concat", mode="sum".
    out = qr_embedding_bag(idx_multi, weight_q, weight_r,
                           num_collisions=num_collisions,
                           mode="sum", operation="concat", block_b=8)
    out = jax.block_until_ready(out)
    ref = _reference(idx_multi, weight_q, weight_r,
                     num_collisions=num_collisions, mode="sum", operation="concat")
    np.testing.assert_allclose(np.asarray(out), np.asarray(ref), rtol=1e-5, atol=1e-5)

    # 3) bf16-table MXU path (counts are exact small integers -> exact f32 accumulation).
    out = qr_embedding_bag(idx_small, weight_q, weight_r,
                           num_collisions=num_collisions,
                           mode="mean", operation="mult",
                           compute_dtype=jnp.bfloat16)
    out = jax.block_until_ready(out)
    ref = _reference(idx_small,
                     weight_q.astype(jnp.bfloat16).astype(jnp.float32),
                     weight_r.astype(jnp.bfloat16).astype(jnp.float32),
                     num_collisions=num_collisions, mode="mean", operation="mult")
    np.testing.assert_allclose(np.asarray(out), np.asarray(ref), rtol=1e-4, atol=1e-5)

    print("KERNEL_OK")
</pallas_src>

<mosaic_0001>
module attributes {stable_mosaic.version = 11 : i64} {
  func.func @_qr_embedding_bag_kernel(%arg0: i32, %arg1: memref<8x8xi32, #tpu.memory_space<vmem>>, %arg2: memref<16x32xf32, #tpu.memory_space<vmem>>, %arg3: memref<4x32xf32, #tpu.memory_space<vmem>>, %arg4: memref<8x32xf32, #tpu.memory_space<vmem>>) attributes {dimension_semantics = [#tpu.dimension_semantics<parallel>], iteration_bounds = array<i64: 1>, scalar_prefetch = 0 : i64, scratch_operands = 0 : i64, tpu.core_type = #tpu.core_type<tc>, window_params = [{transform_indices = @transform_0, window_bounds = array<i64: 8, 8>}, {pipeline_mode = #tpu.pipeline_mode<synchronous>, transform_indices = @transform_1, window_bounds = array<i64: 16, 32>}, {pipeline_mode = #tpu.pipeline_mode<synchronous>, transform_indices = @transform_2, window_bounds = array<i64: 4, 32>}, {transform_indices = @transform_3, window_bounds = array<i64: 8, 32>}]} {
    %c0 = arith.constant 0 : index
    %c0_0 = arith.constant 0 : index
    %0 = vector.load %arg1[%c0, %c0_0] : memref<8x8xi32, #tpu.memory_space<vmem>>, vector<8x8xi32>
    %c2_i32 = arith.constant 2 : i32
    %1 = vector.broadcast %c2_i32 : i32 to vector<8x8xi32>
    %2 = arith.shrsi %0, %1 : vector<8x8xi32>
    %c3_i32 = arith.constant 3 : i32
    %3 = vector.broadcast %c3_i32 : i32 to vector<8x8xi32>
    %4 = arith.andi %0, %3 : vector<8x8xi32>
    %5 = tpu.iota {dimensions = array<i32: 1>} : vector<8x16xi32>
    %6 = tpu.iota {dimensions = array<i32: 1>} : vector<8x4xi32>
    %cst = arith.constant 0.000000e+00 : f32
    %7 = vector.broadcast %cst : f32 to vector<8x16xf32>
    %cst_1 = arith.constant 0.000000e+00 : f32
    %8 = vector.broadcast %cst_1 : f32 to vector<8x4xf32>
    %9 = vector.extract_strided_slice %2 {offsets = [0, 0], sizes = [8, 1], strides = [1, 1]} : vector<8x8xi32> to vector<8x1xi32>
    %10 = vector.extract_strided_slice %4 {offsets = [0, 0], sizes = [8, 1], strides = [1, 1]} : vector<8x8xi32> to vector<8x1xi32>
    %11 = vector.broadcast %9 : vector<8x1xi32> to vector<8x16xi32>
    %12 = arith.cmpi eq, %11, %5 : vector<8x16xi32>
    %13 = arith.extui %12 : vector<8x16xi1> to vector<8x16xi32>
    %14 = arith.sitofp %13 : vector<8x16xi32> to vector<8x16xf32>
    %15 = arith.addf %7, %14 : vector<8x16xf32>
    %16 = vector.broadcast %10 : vector<8x1xi32> to vector<8x4xi32>
    %17 = arith.cmpi eq, %16, %6 : vector<8x4xi32>
    %18 = arith.extui %17 : vector<8x4xi1> to vector<8x4xi32>
    %19 = arith.sitofp %18 : vector<8x4xi32> to vector<8x4xf32>
    %20 = arith.addf %8, %19 : vector<8x4xf32>
    %21 = vector.extract_strided_slice %2 {offsets = [0, 1], sizes = [8, 1], strides = [1, 1]} : vector<8x8xi32> to vector<8x1xi32>
    %22 = vector.extract_strided_slice %4 {offsets = [0, 1], sizes = [8, 1], strides = [1, 1]} : vector<8x8xi32> to vector<8x1xi32>
    %23 = vector.broadcast %21 : vector<8x1xi32> to vector<8x16xi32>
    %24 = arith.cmpi eq, %23, %5 : vector<8x16xi32>
    %25 = arith.extui %24 : vector<8x16xi1> to vector<8x16xi32>
    %26 = arith.sitofp %25 : vector<8x16xi32> to vector<8x16xf32>
    %27 = arith.addf %15, %26 : vector<8x16xf32>
    %28 = vector.broadcast %22 : vector<8x1xi32> to vector<8x4xi32>
    %29 = arith.cmpi eq, %28, %6 : vector<8x4xi32>
    %30 = arith.extui %29 : vector<8x4xi1> to vector<8x4xi32>
    %31 = arith.sitofp %30 : vector<8x4xi32> to vector<8x4xf32>
    %32 = arith.addf %20, %31 : vector<8x4xf32>
    %33 = vector.extract_strided_slice %2 {offsets = [0, 2], sizes = [8, 1], strides = [1, 1]} : vector<8x8xi32> to vector<8x1xi32>
    %34 = vector.extract_strided_slice %4 {offsets = [0, 2], sizes = [8, 1], strides = [1, 1]} : vector<8x8xi32> to vector<8x1xi32>
    %35 = vector.broadcast %33 : vector<8x1xi32> to vector<8x16xi32>
    %36 = arith.cmpi eq, %35, %5 : vector<8x16xi32>
    %37 = arith.extui %36 : vector<8x16xi1> to vector<8x16xi32>
    %38 = arith.sitofp %37 : vector<8x16xi32> to vector<8x16xf32>
    %39 = arith.addf %27, %38 : vector<8x16xf32>
    %40 = vector.broadcast %34 : vector<8x1xi32> to vector<8x4xi32>
    %41 = arith.cmpi eq, %40, %6 : vector<8x4xi32>
    %42 = arith.extui %41 : vector<8x4xi1> to vector<8x4xi32>
    %43 = arith.sitofp %42 : vector<8x4xi32> to vector<8x4xf32>
    %44 = arith.addf %32, %43 : vector<8x4xf32>
    %45 = vector.extract_strided_slice %2 {offsets = [0, 3], sizes = [8, 1], strides = [1, 1]} : vector<8x8xi32> to vector<8x1xi32>
    %46 = vector.extract_strided_slice %4 {offsets = [0, 3], sizes = [8, 1], strides = [1, 1]} : vector<8x8xi32> to vector<8x1xi32>
    %47 = vector.broadcast %45 : vector<8x1xi32> to vector<8x16xi32>
    %48 = arith.cmpi eq, %47, %5 : vector<8x16xi32>
    %49 = arith.extui %48 : vector<8x16xi1> to vector<8x16xi32>
    %50 = arith.sitofp %49 : vector<8x16xi32> to vector<8x16xf32>
    %51 = arith.addf %39, %50 : vector<8x16xf32>
    %52 = vector.broadcast %46 : vector<8x1xi32> to vector<8x4xi32>
    %53 = arith.cmpi eq, %52, %6 : vector<8x4xi32>
    %54 = arith.extui %53 : vector<8x4xi1> to vector<8x4xi32>
    %55 = arith.sitofp %54 : vector<8x4xi32> to vector<8x4xf32>
    %56 = arith.addf %44, %55 : vector<8x4xf32>
    %57 = vector.extract_strided_slice %2 {offsets = [0, 4], sizes = [8, 1], strides = [1, 1]} : vector<8x8xi32> to vector<8x1xi32>
    %58 = vector.extract_strided_slice %4 {offsets = [0, 4], sizes = [8, 1], strides = [1, 1]} : vector<8x8xi32> to vector<8x1xi32>
    %59 = vector.broadcast %57 : vector<8x1xi32> to vector<8x16xi32>
    %60 = arith.cmpi eq, %59, %5 : vector<8x16xi32>
    %61 = arith.extui %60 : vector<8x16xi1> to vector<8x16xi32>
    %62 = arith.sitofp %61 : vector<8x16xi32> to vector<8x16xf32>
    %63 = arith.addf %51, %62 : vector<8x16xf32>
    %64 = vector.broadcast %58 : vector<8x1xi32> to vector<8x4xi32>
    %65 = arith.cmpi eq, %64, %6 : vector<8x4xi32>
    %66 = arith.extui %65 : vector<8x4xi1> to vector<8x4xi32>
    %67 = arith.sitofp %66 : vector<8x4xi32> to vector<8x4xf32>
    %68 = arith.addf %56, %67 : vector<8x4xf32>
    %69 = vector.extract_strided_slice %2 {offsets = [0, 5], sizes = [8, 1], strides = [1, 1]} : vector<8x8xi32> to vector<8x1xi32>
    %70 = vector.extract_strided_slice %4 {offsets = [0, 5], sizes = [8, 1], strides = [1, 1]} : vector<8x8xi32> to vector<8x1xi32>
    %71 = vector.broadcast %69 : vector<8x1xi32> to vector<8x16xi32>
    %72 = arith.cmpi eq, %71, %5 : vector<8x16xi32>
    %73 = arith.extui %72 : vector<8x16xi1> to vector<8x16xi32>
    %74 = arith.sitofp %73 : vector<8x16xi32> to vector<8x16xf32>
    %75 = arith.addf %63, %74 : vector<8x16xf32>
    %76 = vector.broadcast %70 : vector<8x1xi32> to vector<8x4xi32>
    %77 = arith.cmpi eq, %76, %6 : vector<8x4xi32>
    %78 = arith.extui %77 : vector<8x4xi1> to vector<8x4xi32>
    %79 = arith.sitofp %78 : vector<8x4xi32> to vector<8x4xf32>
    %80 = arith.addf %68, %79 : vector<8x4xf32>
    %81 = vector.extract_strided_slice %2 {offsets = [0, 6], sizes = [8, 1], strides = [1, 1]} : vector<8x8xi32> to vector<8x1xi32>
    %82 = vector.extract_strided_slice %4 {offsets = [0, 6], sizes = [8, 1], strides = [1, 1]} : vector<8x8xi32> to vector<8x1xi32>
    %83 = vector.broadcast %81 : vector<8x1xi32> to vector<8x16xi32>
    %84 = arith.cmpi eq, %83, %5 : vector<8x16xi32>
    %85 = arith.extui %84 : vector<8x16xi1> to vector<8x16xi32>
    %86 = arith.sitofp %85 : vector<8x16xi32> to vector<8x16xf32>
    %87 = arith.addf %75, %86 : vector<8x16xf32>
    %88 = vector.broadcast %82 : vector<8x1xi32> to vector<8x4xi32>
    %89 = arith.cmpi eq, %88, %6 : vector<8x4xi32>
    %90 = arith.extui %89 : vector<8x4xi1> to vector<8x4xi32>
    %91 = arith.sitofp %90 : vector<8x4xi32> to vector<8x4xf32>
    %92 = arith.addf %80, %91 : vector<8x4xf32>
    %93 = vector.extract_strided_slice %2 {offsets = [0, 7], sizes = [8, 1], strides = [1, 1]} : vector<8x8xi32> to vector<8x1xi32>
    %94 = vector.extract_strided_slice %4 {offsets = [0, 7], sizes = [8, 1], strides = [1, 1]} : vector<8x8xi32> to vector<8x1xi32>
    %95 = vector.broadcast %93 : vector<8x1xi32> to vector<8x16xi32>
    %96 = arith.cmpi eq, %95, %5 : vector<8x16xi32>
    %97 = arith.extui %96 : vector<8x16xi1> to vector<8x16xi32>
    %98 = arith.sitofp %97 : vector<8x16xi32> to vector<8x16xf32>
    %99 = arith.addf %87, %98 : vector<8x16xf32>
    %100 = vector.broadcast %94 : vector<8x1xi32> to vector<8x4xi32>
    %101 = arith.cmpi eq, %100, %6 : vector<8x4xi32>
    %102 = arith.extui %101 : vector<8x4xi1> to vector<8x4xi32>
    %103 = arith.sitofp %102 : vector<8x4xi32> to vector<8x4xf32>
    %104 = arith.addf %92, %103 : vector<8x4xf32>
    %c0_2 = arith.constant 0 : index
    %c0_3 = arith.constant 0 : index
    %105 = vector.load %arg2[%c0_2, %c0_3] : memref<16x32xf32, #tpu.memory_space<vmem>>, vector<16x32xf32>
    %cst_4 = arith.constant dense<0.000000e+00> : vector<8x32xf32>
    %106 = tpu.matmul %99, %105, %cst_4 {dimension_numbers = #tpu.dot_dimension_numbers<[1], [0], [0], [1], [0, 0, 1, 1], [], []>} : vector<8x16xf32>, vector<16x32xf32>, vector<8x32xf32> -> vector<8x32xf32>
    %c0_5 = arith.constant 0 : index
    %c0_6 = arith.constant 0 : index
    %107 = vector.load %arg3[%c0_5, %c0_6] : memref<4x32xf32, #tpu.memory_space<vmem>>, vector<4x32xf32>
    %108 = vector.extract_strided_slice %104 {offsets = [0, 0], sizes = [8, 1], strides = [1, 1]} : vector<8x4xf32> to vector<8x1xf32>
    %109 = vector.extract_strided_slice %107 {offsets = [0, 0], sizes = [1, 32], strides = [1, 1]} : vector<4x32xf32> to vector<1x32xf32>
    %110 = vector.broadcast %108 : vector<8x1xf32> to vector<8x32xf32>
    %111 = vector.broadcast %109 : vector<1x32xf32> to vector<8x32xf32>
    %112 = arith.mulf %110, %111 : vector<8x32xf32>
    %113 = vector.extract_strided_slice %104 {offsets = [0, 1], sizes = [8, 1], strides = [1, 1]} : vector<8x4xf32> to vector<8x1xf32>
    %114 = vector.extract_strided_slice %107 {offsets = [1, 0], sizes = [1, 32], strides = [1, 1]} : vector<4x32xf32> to vector<1x32xf32>
    %115 = vector.broadcast %113 : vector<8x1xf32> to vector<8x32xf32>
    %116 = vector.broadcast %114 : vector<1x32xf32> to vector<8x32xf32>
    %117 = arith.mulf %115, %116 : vector<8x32xf32>
    %118 = arith.addf %112, %117 : vector<8x32xf32>
    %119 = vector.extract_strided_slice %104 {offsets = [0, 2], sizes = [8, 1], strides = [1, 1]} : vector<8x4xf32> to vector<8x1xf32>
    %120 = vector.extract_strided_slice %107 {offsets = [2, 0], sizes = [1, 32], strides = [1, 1]} : vector<4x32xf32> to vector<1x32xf32>
    %121 = vector.broadcast %119 : vector<8x1xf32> to vector<8x32xf32>
    %122 = vector.broadcast %120 : vector<1x32xf32> to vector<8x32xf32>
    %123 = arith.mulf %121, %122 : vector<8x32xf32>
    %124 = arith.addf %118, %123 : vector<8x32xf32>
    %125 = vector.extract_strided_slice %104 {offsets = [0, 3], sizes = [8, 1], strides = [1, 1]} : vector<8x4xf32> to vector<8x1xf32>
    %126 = vector.extract_strided_slice %107 {offsets = [3, 0], sizes = [1, 32], strides = [1, 1]} : vector<4x32xf32> to vector<1x32xf32>
    %127 = vector.broadcast %125 : vector<8x1xf32> to vector<8x32xf32>
    %128 = vector.broadcast %126 : vector<1x32xf32> to vector<8x32xf32>
    %129 = arith.mulf %127, %128 : vector<8x32xf32>
    %130 = arith.addf %124, %129 : vector<8x32xf32>
    %cst_7 = arith.constant 1.250000e-01 : f32
    %131 = vector.broadcast %cst_7 : f32 to vector<8x32xf32>
    %132 = arith.mulf %106, %131 : vector<8x32xf32>
    %cst_8 = arith.constant 1.250000e-01 : f32
    %133 = vector.broadcast %cst_8 : f32 to vector<8x32xf32>
    %134 = arith.mulf %130, %133 : vector<8x32xf32>
    %135 = arith.mulf %132, %134 : vector<8x32xf32>
    %c0_9 = arith.constant 0 : index
    %c0_10 = arith.constant 0 : index
    %136 = vector.load %arg4[%c0_9, %c0_10] : memref<8x32xf32, #tpu.memory_space<vmem>>, vector<8x32xf32>
    tpu.vector_store %arg4[%c0_9, %c0_10], %135 {strides = array<i32>} : memref<8x32xf32, #tpu.memory_space<vmem>>, vector<8x32xf32>,
    return
  }
  func.func @transform_0(%arg0: i32) -> (i32, i32) {
    %c0_i32 = arith.constant 0 : i32
    %c0_i32_0 = arith.constant 0 : i32
    return %arg0, %c0_i32 : i32, i32
  }
  func.func @transform_1(%arg0: i32) -> (i32, i32) {
    %c0_i32 = arith.constant 0 : i32
    %c0_i32_0 = arith.constant 0 : i32
    %c0_i32_1 = arith.constant 0 : i32
    return %c0_i32, %c0_i32_0 : i32, i32
  }
  func.func @transform_2(%arg0: i32) -> (i32, i32) {
    %c0_i32 = arith.constant 0 : i32
    %c0_i32_0 = arith.constant 0 : i32
    %c0_i32_1 = arith.constant 0 : i32
    return %c0_i32, %c0_i32_0 : i32, i32
  }
  func.func @transform_3(%arg0: i32) -> (i32, i32) {
    %c0_i32 = arith.constant 0 : i32
    %c0_i32_0 = arith.constant 0 : i32
    return %arg0, %c0_i32 : i32, i32
  }
}

</mosaic_0001>

<llo_original>
// kernel: tpu_custom_call.1
$region0: #{tpu_custom_call.1}
  #allocation0 [shape = 'u32[]', space=smem, size = 0x4, offset = 0x4, fixed_abs, tag = 'smem constant byte address 0x4 - core index']
  #allocation1 [shape = 'u32[144,128]{1,0:T(1,128)}', space=vmem, size = 0x12000, scoped, tag = 'internal scratch']
  %s0 = inlined_call_operand.hbm [shape: s32[8,8], index: 0, kind: input, shape index: {}]
  %s1 = inlined_call_operand.hbm [shape: f32[16,32], index: 1, kind: input, shape index: {}]
  %s2 = inlined_call_operand.vmem [shape: f32[4,32], index: 2, kind: input, shape index: {}]
  %s3 = inlined_call_operand.hbm [shape: f32[8,32], index: 3, kind: output, shape index: {}]
  %s4 = sld [smem:[#allocation0]]
  $region30: #{tpu_custom_call.1} parent=0
    _
  %s6 = ssub.s32 1, %s4
  %s7 = scalar_select 0, %s6, %s4
  $region1: #{tpu_custom_call.1} parent=0
    #allocation2 [shape = 'u8[4096]{0}', space=vmem, size = 0x1000, scoped, tag = 'input window, operand 0, single buffered']
    #allocation3 [shape = 's32[1]{0}', space=sflag, size = 0x4, scoped, tag = 'scoped memory for tpu_custom_call.1']
    #allocation4 [shape = 's32[1]{0}', space=sflag, size = 0x4, scoped, tag = 'scoped memory for tpu_custom_call.1']
    #allocation5 [shape = 'u8[8192]{0}', space=vmem, size = 0x2000, scoped, tag = 'input window, operand 1, single buffered']
    #allocation6 [shape = 's32[1]{0}', space=sflag, size = 0x4, scoped, tag = 'scoped memory for tpu_custom_call.1']
    #allocation7 [shape = 'u8[4096]{0}', space=vmem, size = 0x1000, scoped, tag = 'output window, operand 0, single buffered']
    %8 = vsyncpa [#allocation3], 0
    %9 = vsyncpa [#allocation6], 0
    %10 = vsyncpa [#allocation4], 0
    // Predicated region
    $region2: #{tpu_custom_call.1} parent=1 // pred_check
      _
    $region3: #{tpu_custom_call.1} parent=1 // pred_check_branch
      %12 = sbr.rel (0) target = $region5
    $region4: #{tpu_custom_call.1} parent=1 // pred_region
      %s14 = ssub.s32 128, 128
      %15 = vsyncadd [#allocation3], %s14
      %s17 = sshll.u32 [#allocation2], 4
      %s18 = int_to_ptr.vmem [resolvable:$true] %s17
      %20 = dma.hbm_to_vmem [thread:$0]  %s0, 128, %s18, [#allocation3]
    $region5: #{tpu_custom_call.1} parent=1 // pred_fallthru
      _
    // Predicated region
    $region6: #{tpu_custom_call.1} parent=1 // pred_check
      _
    $region7: #{tpu_custom_call.1} parent=1 // pred_check_branch
      %22 = sbr.rel (0) target = $region9
    $region8: #{tpu_custom_call.1} parent=1 // pred_region
      %s24 = ssub.s32 256, 256
      %25 = vsyncadd [#allocation6], %s24
      %s26 = sshll.u32 [#allocation5], 4
      %s27 = int_to_ptr.vmem [resolvable:$true] %s26
      %32 = dma.hbm_to_vmem [thread:$0]  %s1, 256, %s27, [#allocation6], 128, 128, 8
    $region9: #{tpu_custom_call.1} parent=1 // pred_fallthru
      _
    // Predicated region
    $region10: #{tpu_custom_call.1} parent=1 // pred_check
      _
    $region11: #{tpu_custom_call.1} parent=1 // pred_check_branch
      %34 = sbr.rel (0) target = $region13
    $region12: #{tpu_custom_call.1} parent=1 // pred_region
      _
    $region13: #{tpu_custom_call.1} parent=1 // pred_fallthru
      _
    // Predicated region
    $region14: #{tpu_custom_call.1} parent=1 // pred_check
      _
    $region15: #{tpu_custom_call.1} parent=1 // pred_check_branch
      %36 = sbr.rel (0) target = $region17
    $region16: #{tpu_custom_call.1} parent=1 // pred_region
      %37 = dma.done [#allocation3], 128
    $region17: #{tpu_custom_call.1} parent=1 // pred_fallthru
      _
    // Predicated region
    $region18: #{tpu_custom_call.1} parent=1 // pred_check
      _
    $region19: #{tpu_custom_call.1} parent=1 // pred_check_branch
      %39 = sbr.rel (0) target = $region21
    $region20: #{tpu_custom_call.1} parent=1 // pred_region
      %40 = dma.done [#allocation6], 256
    $region21: #{tpu_custom_call.1} parent=1 // pred_fallthru
      _
    %v41 = vld [vmem:[#allocation2] sm:$0xff]
    %v42 = vshra.s32 %v41, 2
    %v43 = vand.u32 %v41, 3
    %v44 = vlaneseq
    %v45 = vand.u32 %v44, 127
    %46 = vset.pattern.permute.xlu0 0
    %47 = vperm.xlu0 %46, %v42
    %v48 = vpop.permute.xlu0 %47
    %vm49 = vcmp.eq.s32.totalorder %v48, %v45
    %v50 = vsel %vm49, 1, 0
    %v51 = vcvt.s32.f32 %v50
    %v52 = vadd.f32 %v51, 0.0
    %53 = vset.pattern.permute.xlu0 0
    %54 = vperm.xlu0 %53, %v43
    %v55 = vpop.permute.xlu0 %54
    %vm56 = vcmp.eq.s32.totalorder %v55, %v45
    %v57 = vsel %vm56, 1, 0
    %v58 = vcvt.s32.f32 %v57
    %v59 = vadd.f32 %v58, 0.0
    %60 = vset.pattern.permute.xlu0 1
    %61 = vperm.xlu0 %60, %v42
    %v62 = vpop.permute.xlu0 %61
    %vm63 = vcmp.eq.s32.totalorder %v62, %v45
    %v64 = vsel %vm63, 1, 0
    %v65 = vcvt.s32.f32 %v64
    %v66 = vadd.f32 %v52, %v65
    %67 = vset.pattern.permute.xlu0 1
    %68 = vperm.xlu0 %67, %v43
    %v69 = vpop.permute.xlu0 %68
    %vm70 = vcmp.eq.s32.totalorder %v69, %v45
    %v71 = vsel %vm70, 1, 0
    %v72 = vcvt.s32.f32 %v71
    %v73 = vadd.f32 %v59, %v72
    %74 = vset.pattern.permute.xlu0 2
    %75 = vperm.xlu0 %74, %v42
    %v76 = vpop.permute.xlu0 %75
    %vm77 = vcmp.eq.s32.totalorder %v76, %v45
    %v78 = vsel %vm77, 1, 0
    %v79 = vcvt.s32.f32 %v78
    %v80 = vadd.f32 %v66, %v79
    %81 = vset.pattern.permute.xlu0 2
    %82 = vperm.xlu0 %81, %v43
    %v83 = vpop.permute.xlu0 %82
    %vm84 = vcmp.eq.s32.totalorder %v83, %v45
    %v85 = vsel %vm84, 1, 0
    %v86 = vcvt.s32.f32 %v85
    %v87 = vadd.f32 %v73, %v86
    %88 = vset.pattern.permute.xlu0 3
    %89 = vperm.xlu0 %88, %v42
    %v90 = vpop.permute.xlu0 %89
    %vm91 = vcmp.eq.s32.totalorder %v90, %v45
    %v92 = vsel %vm91, 1, 0
    %v93 = vcvt.s32.f32 %v92
    %v94 = vadd.f32 %v80, %v93
    %95 = vset.pattern.permute.xlu0 3
    %96 = vperm.xlu0 %95, %v43
    %v97 = vpop.permute.xlu0 %96
    %vm98 = vcmp.eq.s32.totalorder %v97, %v45
    %v99 = vsel %vm98, 1, 0
    %v100 = vcvt.s32.f32 %v99
    %v101 = vadd.f32 %v87, %v100
    %102 = vset.pattern.permute.xlu0 4
    %103 = vperm.xlu0 %102, %v42
    %v104 = vpop.permute.xlu0 %103
    %vm105 = vcmp.eq.s32.totalorder %v104, %v45
    %v106 = vsel %vm105, 1, 0
    %v107 = vcvt.s32.f32 %v106
    %v108 = vadd.f32 %v94, %v107
    %109 = vset.pattern.permute.xlu0 4
    %110 = vperm.xlu0 %109, %v43
    %v111 = vpop.permute.xlu0 %110
    %vm112 = vcmp.eq.s32.totalorder %v111, %v45
    %v113 = vsel %vm112, 1, 0
    %v114 = vcvt.s32.f32 %v113
    %v115 = vadd.f32 %v101, %v114
    %116 = vset.pattern.permute.xlu0 5
    %117 = vperm.xlu0 %116, %v42
    %v118 = vpop.permute.xlu0 %117
    %vm119 = vcmp.eq.s32.totalorder %v118, %v45
    %v120 = vsel %vm119, 1, 0
    %v121 = vcvt.s32.f32 %v120
    %v122 = vadd.f32 %v108, %v121
    %123 = vset.pattern.permute.xlu0 5
    %124 = vperm.xlu0 %123, %v43
    %v125 = vpop.permute.xlu0 %124
    %vm126 = vcmp.eq.s32.totalorder %v125, %v45
    %v127 = vsel %vm126, 1, 0
    %v128 = vcvt.s32.f32 %v127
    %v129 = vadd.f32 %v115, %v128
    %130 = vset.pattern.permute.xlu0 6
    %131 = vperm.xlu0 %130, %v42
    %v132 = vpop.permute.xlu0 %131
    %vm133 = vcmp.eq.s32.totalorder %v132, %v45
    %v134 = vsel %vm133, 1, 0
    %v135 = vcvt.s32.f32 %v134
    %v136 = vadd.f32 %v122, %v135
    %137 = vset.pattern.permute.xlu0 6
    %138 = vperm.xlu0 %137, %v43
    %v139 = vpop.permute.xlu0 %138
    %vm140 = vcmp.eq.s32.totalorder %v139, %v45
    %v141 = vsel %vm140, 1, 0
    %v142 = vcvt.s32.f32 %v141
    %v143 = vadd.f32 %v129, %v142
    %144 = vset.pattern.permute.xlu0 7
    %145 = vperm.xlu0 %144, %v42
    %v146 = vpop.permute.xlu0 %145
    %vm147 = vcmp.eq.s32.totalorder %v146, %v45
    %v148 = vsel %vm147, 1, 0
    %v149 = vcvt.s32.f32 %v148
    %v150 = vadd.f32 %v136, %v149
    %151 = vset.pattern.permute.xlu0 7
    %152 = vperm.xlu0 %151, %v43
    %v153 = vpop.permute.xlu0 %152
    %vm154 = vcmp.eq.s32.totalorder %v153, %v45
    %v155 = vsel %vm154, 1, 0
    %v156 = vcvt.s32.f32 %v155
    %v157 = vadd.f32 %v143, %v156
    %v158 = vld [vmem:[#allocation5] sm:$0xff]
    %v159 = vld [vmem:[#allocation5 + $0x8] sm:$0xff]
    %vm160 = vcmask 130048
    %v162 = vsel %vm160, %v150, 0
    %164 = vmatprep.subr.mxu0 0.0
    %165 = vmatpush1.msra.mxu0 %v158
    %166 = vmatprep.subr.mxu0 0.0
    %167 = vmatpush1.msra.mxu0 %v159
    %168 = vmatprep.subr.mxu0 0.0
    %169 = vmatpush1.msra.mxu0 0.0
    %170 = vmatprep.subr.mxu0 0.0
    %171 = vmatpush1.msra.mxu0 0.0
    %172 = vmatprep.subr.mxu0 0.0
    %173 = vmatpush1.msra.mxu0 0.0
    %174 = vmatprep.subr.mxu0 0.0
    %175 = vmatpush1.msra.mxu0 0.0
    %176 = vmatprep.subr.mxu0 0.0
    %177 = vmatpush1.msra.mxu0 0.0
    %178 = vmatprep.subr.mxu0 0.0
    %179 = vmatpush1.msra.mxu0 0.0
    %180 = vmatprep.subr.mxu0 0.0
    %181 = vmatpush1.msra.mxu0 0.0
    %182 = vmatprep.subr.mxu0 0.0
    %183 = vmatpush1.msra.mxu0 0.0
    %184 = vmatprep.subr.mxu0 0.0
    %185 = vmatpush1.msra.mxu0 0.0
    %186 = vmatprep.subr.mxu0 0.0
    %187 = vmatpush1.msra.mxu0 0.0
    %188 = vmatprep.subr.mxu0 0.0
    %189 = vmatpush1.msra.mxu0 0.0
    %190 = vmatprep.subr.mxu0 0.0
    %191 = vmatpush1.msra.mxu0 0.0
    %192 = vmatprep.subr.mxu0 0.0
    %193 = vmatpush1.msra.mxu0 0.0
    %194 = vmatprep.subr.mxu0 0.0
    %195 = vmatpush1.msra.mxu0 0.0
    %196 = vmatprep.subr.mxu0 0.0
    %197 = vmatpush1.msra.mxu0 0.0
    %198 = vmatprep.subr.mxu0 0.0
    %199 = vmatpush1.msra.mxu0 0.0
    %200 = vmatprep.subr.mxu0 0.0
    %201 = vmatpush1.msra.mxu0 0.0
    %202 = vmatprep.subr.mxu0 0.0
    %203 = vmatpush1.msra.mxu0 0.0
    %204 = vmatprep.subr.mxu0 0.0
    %205 = vmatpush1.msra.mxu0 0.0
    %206 = vmatprep.subr.mxu0 0.0
    %207 = vmatpush1.msra.mxu0 0.0
    %208 = vmatprep.subr.mxu0 0.0
    %209 = vmatpush1.msra.mxu0 0.0
    %210 = vmatprep.subr.mxu0 0.0
    %211 = vmatpush1.msra.mxu0 0.0
    %212 = vmatprep.subr.mxu0 0.0
    %213 = vmatpush1.msra.mxu0 0.0
    %214 = vmatprep.subr.mxu0 0.0
    %215 = vmatpush1.msra.mxu0 0.0
    %216 = vmatprep.subr.mxu0 0.0
    %217 = vmatpush1.msra.mxu0 0.0
    %218 = vmatprep.subr.mxu0 0.0
    %219 = vmatpush1.msra.mxu0 0.0
    %220 = vmatprep.subr.mxu0 0.0
    %221 = vmatpush1.msra.mxu0 0.0
    %222 = vmatprep.subr.mxu0 0.0
    %223 = vmatpush1.msra.mxu0 0.0
    %224 = vmatprep.subr.mxu0 0.0
    %225 = vmatpush1.msra.mxu0 0.0
    %226 = vmatprep.subr.mxu0 0.0
    %227 = vmatpush1.msra.mxu0 0.0
    %228 = vmatprep.mubr.f32.mxu0 0.0
    %229 = vmatmul.mubr.f32.gmra.mrb[0].mxu0 %v162
    %v230 = vpop.f32.mrb[0].mxu0
    %v231 = vadd.f32 0.0, %v230
    %v232 = vpop.f32.mrb[0].mxu0
    %233 = vdwg.mxu0
    %v234 = vld [vmem:[%s2] sm:$0xf]
    %236 = vset.pattern.permute.xlu0 0
    %237 = vperm.xlu0 %236, %v157
    %v238 = vpop.permute.xlu0 %237
    %v240 = vlaneseq
    %v241 = vshrl.u32 %v240, 7
    %v242 = vsub.s32 0, %v241
    %v243 = vrot.slane %v234, %v242
    %v244 = vmul.f32 %v238, %v243
    %245 = vset.pattern.permute.xlu0 1
    %246 = vperm.xlu0 %245, %v157
    %v247 = vpop.permute.xlu0 %246
    %v249 = vlaneseq
    %v250 = vshrl.u32 %v249, 7
    %v251 = vsub.s32 1, %v250
    %v252 = vrot.slane %v234, %v251
    %v253 = vmul.f32 %v247, %v252
    %v254 = vadd.f32 %v244, %v253
    %255 = vset.pattern.permute.xlu0 2
    %256 = vperm.xlu0 %255, %v157
    %v257 = vpop.permute.xlu0 %256
    %v259 = vlaneseq
    %v260 = vshrl.u32 %v259, 7
    %v261 = vsub.s32 2, %v260
    %v262 = vrot.slane %v234, %v261
    %v263 = vmul.f32 %v257, %v262
    %v264 = vadd.f32 %v254, %v263
    %265 = vset.pattern.permute.xlu0 3
    %266 = vperm.xlu0 %265, %v157
    %v267 = vpop.permute.xlu0 %266
    %v269 = vlaneseq
    %v270 = vshrl.u32 %v269, 7
    %v271 = vsub.s32 3, %v270
    %v272 = vrot.slane %v234, %v271
    %v273 = vmul.f32 %v267, %v272
    %v274 = vadd.f32 %v264, %v273
    %v275 = vmul.f32 %v231, 0.125
    %v276 = vmul.f32 %v274, 0.125
    %v277 = vmul.f32 %v275, %v276
    %vm278 = vcmask 261120
    %279 = vst.msk [vmem:[#allocation7] sm:$0xff] %vm278, %v277
    // Predicated region
    $region22: #{tpu_custom_call.1} parent=1 // pred_check
      _
    $region23: #{tpu_custom_call.1} parent=1 // pred_check_branch
      %281 = sbr.rel (0) target = $region25
    $region24: #{tpu_custom_call.1} parent=1 // pred_region
      %s283 = ssub.s32 128, 128
      %284 = vsyncadd [#allocation4], %s283
      %s286 = sshll.u32 [#allocation7], 4
      %s287 = int_to_ptr.vmem [resolvable:$true] %s286
      %289 = dma.vmem_to_hbm [thread:$0]  %s287, 128, %s3, [#allocation4]
    $region25: #{tpu_custom_call.1} parent=1 // pred_fallthru
      _
    // Predicated region
    $region26: #{tpu_custom_call.1} parent=1 // pred_check
      _
    $region27: #{tpu_custom_call.1} parent=1 // pred_check_branch
      %291 = sbr.rel (0) target = $region29
    $region28: #{tpu_custom_call.1} parent=1 // pred_region
      %292 = dma.done [#allocation4], 128
    $region29: #{tpu_custom_call.1} parent=1 // pred_fallthru
      _
    %293 = vsyncpa [#allocation3], 1
    %294 = vsyncpa [#allocation6], 1
    %295 = vsyncpa [#allocation4], 1

</llo_original>
